<compile_context>
chip_gen: v6e
topology: v6e:2x2x1
jax: 0.10.0
libtpu: 0.0.40
codegen_flags: <defaults>
</compile_context>

<pallas_src>
import jax
import jax.numpy as jnp
from jax.experimental import pallas as pl
from jax.experimental.pallas import tpu as pltpu

D_IN, D_H1, D_H2, D_OUT = 2, 64, 128, 3
_LANE = 128


def mlp_kernel(x_ref, w1_ref, b1_ref, w2_ref, b2_ref, w3_ref, b3_ref, o_ref):
    # Feature-major: x_ref is (2, tm), o_ref is (3, tm); batch runs along lanes.
    x = x_ref[...]                        # (2, tm)  f32
    w1 = w1_ref[...]                      # (64, 2)  f32

    # Layer 1: K=2 -> keep it off the MXU (it would pad K to 128/256 with
    # zeros).  Two broadcast FMAs: w1[:, k:k+1] is a lane-broadcast,
    # x[k:k+1, :] a sublane-broadcast -- both cheap on the VPU/XLU.
    h1 = w1[:, 0:1] * x[0:1, :] + w1[:, 1:2] * x[1:2, :] + b1_ref[...]
    h1 = jnp.maximum(h1, 0.0)             # (64, tm) f32

    # Layer 2 (dominant FLOPs): MXU matmul, f32 accumulation.
    h1 = h1.astype(w2_ref.dtype)
    h2 = jnp.dot(w2_ref[...], h1, preferred_element_type=jnp.float32) + b2_ref[...]
    h2 = jnp.maximum(h2, 0.0)             # (128, tm) f32

    # Layer 3: MXU matmul; (3, tm) result -> lane-dense store (3 sublanes pad
    # to 8, not 3-of-128 lanes).
    h2 = h2.astype(w3_ref.dtype)
    y = jnp.dot(w3_ref[...], h2, preferred_element_type=jnp.float32) + b3_ref[...]
    o_ref[...] = y.astype(o_ref.dtype)


def _round_up(x, m):
    return ((x + m - 1) // m) * m


def _default_compute_dtype():
    # bf16 matmul operands help v6e/v7x mainly via vreg/VMEM packing; v5e
    # gains little (no bf16 VPU), so keep f32 there.
    try:
        kind = jax.devices()[0].device_kind.lower()
    except Exception:
        return jnp.float32
    if "v5 lite" in kind or "v5e" in kind or "v5litepod" in kind:
        return jnp.float32
    return jnp.bfloat16


def mlp_forward(x, params, *, tile_m=4096, compute_dtype=None):
    """Fused MLP forward.  x: (N, 2) f32 -> (N, 3) f32.

    compute_dtype applies only to the two MXU matmuls (layers 2 & 3);
    layer 1, all bias adds and the accumulation stay f32.
    """
    if compute_dtype is None:
        compute_dtype = _default_compute_dtype()

    w1, b1, w2, b2, w3, b3 = params
    n = x.shape[0]

    # Batch maps to lanes -> tiles are 128-aligned along N.
    n_lanes = _round_up(max(n, 1), _LANE)
    tm = max(_LANE, min(_round_up(tile_m, _LANE), n_lanes))
    # v7x megacore: dimension_semantics=("parallel",) shards the batch grid
    # axis across the 2 TensorCores, so make sure there are >= 2 grid steps
    # whenever there is enough work for two tiles.
    if n_lanes > _LANE and pl.cdiv(n_lanes, tm) < 2:
        tm = _round_up(pl.cdiv(n_lanes, 2), _LANE)
    grid_m = pl.cdiv(n_lanes, tm)
    n_pad = grid_m * tm

    # Feature-major input (2, n_pad); zero-padded columns only ever produce
    # ReLU(bias) values that are sliced off below.
    x_t = jnp.pad(x, ((0, n_pad - n), (0, 0))).T

    # PyTorch-layout (out, in) weights are exactly the transposed-matmul
    # operands; only the two MXU matmul weights are cast to compute_dtype.
    w2c = w2.astype(compute_dtype)
    w3c = w3.astype(compute_dtype)
    b1c = b1.reshape(D_H1, 1)
    b2c = b2.reshape(D_H2, 1)
    b3c = b3.reshape(D_OUT, 1)

    const = lambda i: (0, 0)  # weights/biases: same block every step -> resident
    # TODO(synk): pipeline_mode=pl.Buffered(1) on the six constant specs would
    # save their (tiny) double buffers; skipped to keep lowering portable.

    out_t = pl.pallas_call(
        mlp_kernel,
        out_shape=jax.ShapeDtypeStruct((D_OUT, n_pad), jnp.float32),
        grid=(grid_m,),
        in_specs=[
            pl.BlockSpec((D_IN, tm), lambda i: (0, i)),
            pl.BlockSpec((D_H1, D_IN), const),
            pl.BlockSpec((D_H1, 1), const),
            pl.BlockSpec((D_H2, D_H1), const),
            pl.BlockSpec((D_H2, 1), const),
            pl.BlockSpec((D_OUT, D_H2), const),
            pl.BlockSpec((D_OUT, 1), const),
        ],
        out_specs=pl.BlockSpec((D_OUT, tm), lambda i: (0, i)),
        compiler_params=pltpu.CompilerParams(
            dimension_semantics=("parallel",),   # batch axis -> both TCs on v7x
            vmem_limit_bytes=48 * 1024 * 1024,   # headroom above the 16/32 MiB defaults
        ),
    )(x_t, w1, b1c, w2c, b2c, w3c, b3c)

    return out_t[:, :n].T


def init_params(key):
    # Deterministic synthetic init, same shapes/layout as nn.Linear ((out, in)).
    ks = jax.random.split(key, 6)

    def u(k, shape, fan_in):
        s = fan_in ** -0.5
        return jax.random.uniform(k, shape, jnp.float32, -s, s)

    w1 = u(ks[0], (D_H1, D_IN), D_IN)
    b1 = u(ks[1], (D_H1,), D_IN)
    w2 = u(ks[2], (D_H2, D_H1), D_H1)
    b2 = u(ks[3], (D_H2,), D_H1)
    w3 = u(ks[4], (D_OUT, D_H2), D_H2)
    b3 = u(ks[5], (D_OUT,), D_H2)
    return w1, b1, w2, b2, w3, b3


def mlp_reference(x, params):
    w1, b1, w2, b2, w3, b3 = params
    h1 = jnp.maximum(x @ w1.T + b1, 0.0)
    h2 = jnp.maximum(h1 @ w2.T + b2, 0.0)
    return h2 @ w3.T + b3


if __name__ == "__main__":
    key = jax.random.PRNGKey(0)
    k_x, k_p, k_big = jax.random.split(key, 3)
    params = init_params(k_p)

    # 1) Small batch, f32 matmuls: strict parity with the reference math.
    batch = 16
    x = jax.random.normal(k_x, (batch, D_IN), jnp.float32)
    out = jax.block_until_ready(mlp_forward(x, params, compute_dtype=jnp.float32))
    ref = mlp_reference(x, params)
    assert out.shape == (batch, D_OUT)
    assert jnp.allclose(out, ref, atol=1e-5, rtol=1e-5)

    # 2) Non-tile-multiple batch: padding + multi-step grid + megacore split.
    big = 1100
    xb = jax.random.normal(k_big, (big, D_IN), jnp.float32)
    out_b = jax.block_until_ready(mlp_forward(xb, params, compute_dtype=jnp.float32))
    ref_b = mlp_reference(xb, params)
    assert out_b.shape == (big, D_OUT)
    assert jnp.allclose(out_b, ref_b, atol=1e-5, rtol=1e-5)

    # 3) Default (generation-aware) compute dtype: bf16 matmuls on v6e/v7x.
    out_d = jax.block_until_ready(mlp_forward(xb, params))
    assert out_d.shape == (big, D_OUT)
    assert jnp.allclose(out_d, ref_b, atol=5e-2, rtol=5e-2)

    print("KERNEL_OK")
</pallas_src>

<mosaic_0001>
module attributes {stable_mosaic.version = 11 : i64} {
  func.func @mlp_kernel(%arg0: i32, %arg1: memref<2x128xf32, #tpu.memory_space<vmem>>, %arg2: memref<64x2xf32, #tpu.memory_space<vmem>>, %arg3: memref<64x1xf32, #tpu.memory_space<vmem>>, %arg4: memref<128x64xf32, #tpu.memory_space<vmem>>, %arg5: memref<128x1xf32, #tpu.memory_space<vmem>>, %arg6: memref<3x128xf32, #tpu.memory_space<vmem>>, %arg7: memref<3x1xf32, #tpu.memory_space<vmem>>, %arg8: memref<3x128xf32, #tpu.memory_space<vmem>>) attributes {dimension_semantics = [#tpu.dimension_semantics<parallel>], iteration_bounds = array<i64: 1>, scalar_prefetch = 0 : i64, scratch_operands = 0 : i64, tpu.core_type = #tpu.core_type<tc>, window_params = [{transform_indices = @transform_0, window_bounds = array<i64: 2, 128>}, {pipeline_mode = #tpu.pipeline_mode<synchronous>, transform_indices = @transform_1, window_bounds = array<i64: 64, 2>}, {pipeline_mode = #tpu.pipeline_mode<synchronous>, transform_indices = @transform_2, window_bounds = array<i64: 64, 1>}, {pipeline_mode = #tpu.pipeline_mode<synchronous>, transform_indices = @transform_3, window_bounds = array<i64: 128, 64>}, {pipeline_mode = #tpu.pipeline_mode<synchronous>, transform_indices = @transform_4, window_bounds = array<i64: 128, 1>}, {pipeline_mode = #tpu.pipeline_mode<synchronous>, transform_indices = @transform_5, window_bounds = array<i64: 3, 128>}, {pipeline_mode = #tpu.pipeline_mode<synchronous>, transform_indices = @transform_6, window_bounds = array<i64: 3, 1>}, {transform_indices = @transform_7, window_bounds = array<i64: 3, 128>}]} {
    %c0 = arith.constant 0 : index
    %c0_0 = arith.constant 0 : index
    %0 = vector.load %arg1[%c0, %c0_0] : memref<2x128xf32, #tpu.memory_space<vmem>>, vector<2x128xf32>
    %c0_1 = arith.constant 0 : index
    %c0_2 = arith.constant 0 : index
    %1 = vector.load %arg2[%c0_1, %c0_2] : memref<64x2xf32, #tpu.memory_space<vmem>>, vector<64x2xf32>
    %2 = vector.extract_strided_slice %1 {offsets = [0, 0], sizes = [64, 1], strides = [1, 1]} : vector<64x2xf32> to vector<64x1xf32>
    %3 = vector.extract_strided_slice %0 {offsets = [0, 0], sizes = [1, 128], strides = [1, 1]} : vector<2x128xf32> to vector<1x128xf32>
    %4 = vector.broadcast %2 : vector<64x1xf32> to vector<64x128xf32>
    %5 = vector.broadcast %3 : vector<1x128xf32> to vector<64x128xf32>
    %6 = arith.mulf %4, %5 : vector<64x128xf32>
    %7 = vector.extract_strided_slice %1 {offsets = [0, 1], sizes = [64, 1], strides = [1, 1]} : vector<64x2xf32> to vector<64x1xf32>
    %8 = vector.extract_strided_slice %0 {offsets = [1, 0], sizes = [1, 128], strides = [1, 1]} : vector<2x128xf32> to vector<1x128xf32>
    %9 = vector.broadcast %7 : vector<64x1xf32> to vector<64x128xf32>
    %10 = vector.broadcast %8 : vector<1x128xf32> to vector<64x128xf32>
    %11 = arith.mulf %9, %10 : vector<64x128xf32>
    %12 = arith.addf %6, %11 : vector<64x128xf32>
    %c0_3 = arith.constant 0 : index
    %c0_4 = arith.constant 0 : index
    %13 = vector.load %arg3[%c0_3, %c0_4] : memref<64x1xf32, #tpu.memory_space<vmem>>, vector<64x1xf32>
    %14 = vector.broadcast %13 : vector<64x1xf32> to vector<64x128xf32>
    %15 = arith.addf %12, %14 : vector<64x128xf32>
    %cst = arith.constant 0.000000e+00 : f32
    %16 = vector.broadcast %cst : f32 to vector<64x128xf32>
    %17 = arith.maximumf %15, %16 : vector<64x128xf32>
    %c0_5 = arith.constant 0 : index
    %c0_6 = arith.constant 0 : index
    %18 = vector.load %arg4[%c0_5, %c0_6] : memref<128x64xf32, #tpu.memory_space<vmem>>, vector<128x64xf32>
    %cst_7 = arith.constant dense<0.000000e+00> : vector<128x128xf32>
    %19 = tpu.matmul %18, %17, %cst_7 {dimension_numbers = #tpu.dot_dimension_numbers<[1], [0], [0], [1], [0, 0, 1, 1], [], []>} : vector<128x64xf32>, vector<64x128xf32>, vector<128x128xf32> -> vector<128x128xf32>
    %c0_8 = arith.constant 0 : index
    %c0_9 = arith.constant 0 : index
    %20 = vector.load %arg5[%c0_8, %c0_9] : memref<128x1xf32, #tpu.memory_space<vmem>>, vector<128x1xf32>
    %21 = vector.broadcast %20 : vector<128x1xf32> to vector<128x128xf32>
    %22 = arith.addf %19, %21 : vector<128x128xf32>
    %cst_10 = arith.constant 0.000000e+00 : f32
    %23 = vector.broadcast %cst_10 : f32 to vector<128x128xf32>
    %24 = arith.maximumf %22, %23 : vector<128x128xf32>
    %c0_11 = arith.constant 0 : index
    %c0_12 = arith.constant 0 : index
    %25 = vector.load %arg6[%c0_11, %c0_12] : memref<3x128xf32, #tpu.memory_space<vmem>>, vector<3x128xf32>
    %cst_13 = arith.constant dense<0.000000e+00> : vector<3x128xf32>
    %26 = tpu.matmul %25, %24, %cst_13 {dimension_numbers = #tpu.dot_dimension_numbers<[1], [0], [0], [1], [0, 0, 1, 1], [], []>} : vector<3x128xf32>, vector<128x128xf32>, vector<3x128xf32> -> vector<3x128xf32>
    %c0_14 = arith.constant 0 : index
    %c0_15 = arith.constant 0 : index
    %27 = vector.load %arg7[%c0_14, %c0_15] : memref<3x1xf32, #tpu.memory_space<vmem>>, vector<3x1xf32>
    %28 = vector.broadcast %27 : vector<3x1xf32> to vector<3x128xf32>
    %29 = arith.addf %26, %28 : vector<3x128xf32>
    %c0_16 = arith.constant 0 : index
    %c0_17 = arith.constant 0 : index
    %30 = vector.load %arg8[%c0_16, %c0_17] : memref<3x128xf32, #tpu.memory_space<vmem>>, vector<3x128xf32>
    tpu.vector_store %arg8[%c0_16, %c0_17], %29 {strides = array<i32>} : memref<3x128xf32, #tpu.memory_space<vmem>>, vector<3x128xf32>,
    return
  }
  func.func @transform_0(%arg0: i32) -> (i32, i32) {
    %c0_i32 = arith.constant 0 : i32
    %c0_i32_0 = arith.constant 0 : i32
    return %c0_i32, %arg0 : i32, i32
  }
  func.func @transform_1(%arg0: i32) -> (i32, i32) {
    %c0_i32 = arith.constant 0 : i32
    %c0_i32_0 = arith.constant 0 : i32
    %c0_i32_1 = arith.constant 0 : i32
    return %c0_i32, %c0_i32_0 : i32, i32
  }
  func.func @transform_2(%arg0: i32) -> (i32, i32) {
    %c0_i32 = arith.constant 0 : i32
    %c0_i32_0 = arith.constant 0 : i32
    %c0_i32_1 = arith.constant 0 : i32
    return %c0_i32, %c0_i32_0 : i32, i32
  }
  func.func @transform_3(%arg0: i32) -> (i32, i32) {
    %c0_i32 = arith.constant 0 : i32
    %c0_i32_0 = arith.constant 0 : i32
    %c0_i32_1 = arith.constant 0 : i32
    return %c0_i32, %c0_i32_0 : i32, i32
  }
  func.func @transform_4(%arg0: i32) -> (i32, i32) {
    %c0_i32 = arith.constant 0 : i32
    %c0_i32_0 = arith.constant 0 : i32
    %c0_i32_1 = arith.constant 0 : i32
    return %c0_i32, %c0_i32_0 : i32, i32
  }
  func.func @transform_5(%arg0: i32) -> (i32, i32) {
    %c0_i32 = arith.constant 0 : i32
    %c0_i32_0 = arith.constant 0 : i32
    %c0_i32_1 = arith.constant 0 : i32
    return %c0_i32, %c0_i32_0 : i32, i32
  }
  func.func @transform_6(%arg0: i32) -> (i32, i32) {
    %c0_i32 = arith.constant 0 : i32
    %c0_i32_0 = arith.constant 0 : i32
    %c0_i32_1 = arith.constant 0 : i32
    return %c0_i32, %c0_i32_0 : i32, i32
  }
  func.func @transform_7(%arg0: i32) -> (i32, i32) {
    %c0_i32 = arith.constant 0 : i32
    %c0_i32_0 = arith.constant 0 : i32
    return %c0_i32, %arg0 : i32, i32
  }
}

</mosaic_0001>

<llo_original>
// kernel: tpu_custom_call.1
$region0: #{tpu_custom_call.1}
  #allocation0 [shape = 'u32[]', space=smem, size = 0x4, offset = 0x4, fixed_abs, tag = 'smem constant byte address 0x4 - core index']
  #allocation1 [shape = 'u32[144,128]{1,0:T(1,128)}', space=vmem, size = 0x12000, scoped, tag = 'internal scratch']
  %s0 = inlined_call_operand.vmem [shape: f32[2,128], index: 0, kind: input, shape index: {}]
  %s1 = inlined_call_operand.vmem [shape: f32[64,2], index: 1, kind: input, shape index: {}]
  %s2 = inlined_call_operand.vmem [shape: f32[64,1], index: 2, kind: input, shape index: {}]
  %s3 = inlined_call_operand.vmem [shape: f32[128,64], index: 3, kind: input, shape index: {}]
  %s4 = inlined_call_operand.vmem [shape: f32[128,1], index: 4, kind: input, shape index: {}]
  %s5 = inlined_call_operand.vmem [shape: f32[3,128], index: 5, kind: input, shape index: {}]
  %s6 = inlined_call_operand.vmem [shape: f32[3,1], index: 6, kind: input, shape index: {}]
  %s7 = inlined_call_operand.hbm [shape: f32[3,128], index: 7, kind: output, shape index: {}]
  %s8 = sld [smem:[#allocation0]]
  $region38: #{tpu_custom_call.1} parent=0
    _
  %s10 = ssub.s32 1, %s8
  %s11 = scalar_select 0, %s10, %s8
  $region1: #{tpu_custom_call.1} parent=0
    #allocation2 [shape = 'u8[2048]{0}', space=vmem, size = 0x800, scoped, tag = 'output window, operand 0, single buffered']
    #allocation3 [shape = 's32[1]{0}', space=sflag, size = 0x4, scoped, tag = 'scoped memory for tpu_custom_call.1']
    %12 = vsyncpa [#allocation3], 0
    // Predicated region
    $region2: #{tpu_custom_call.1} parent=1 // pred_check
      _
    $region3: #{tpu_custom_call.1} parent=1 // pred_check_branch
      %14 = sbr.rel (0) target = $region5
    $region4: #{tpu_custom_call.1} parent=1 // pred_region
      _
    $region5: #{tpu_custom_call.1} parent=1 // pred_fallthru
      _
    // Predicated region
    $region6: #{tpu_custom_call.1} parent=1 // pred_check
      _
    $region7: #{tpu_custom_call.1} parent=1 // pred_check_branch
      %16 = sbr.rel (0) target = $region9
    $region8: #{tpu_custom_call.1} parent=1 // pred_region
      _
    $region9: #{tpu_custom_call.1} parent=1 // pred_fallthru
      _
    // Predicated region
    $region10: #{tpu_custom_call.1} parent=1 // pred_check
      _
    $region11: #{tpu_custom_call.1} parent=1 // pred_check_branch
      %18 = sbr.rel (0) target = $region13
    $region12: #{tpu_custom_call.1} parent=1 // pred_region
      _
    $region13: #{tpu_custom_call.1} parent=1 // pred_fallthru
      _
    // Predicated region
    $region14: #{tpu_custom_call.1} parent=1 // pred_check
      _
    $region15: #{tpu_custom_call.1} parent=1 // pred_check_branch
      %20 = sbr.rel (0) target = $region17
    $region16: #{tpu_custom_call.1} parent=1 // pred_region
      _
    $region17: #{tpu_custom_call.1} parent=1 // pred_fallthru
      _
    // Predicated region
    $region18: #{tpu_custom_call.1} parent=1 // pred_check
      _
    $region19: #{tpu_custom_call.1} parent=1 // pred_check_branch
      %22 = sbr.rel (0) target = $region21
    $region20: #{tpu_custom_call.1} parent=1 // pred_region
      _
    $region21: #{tpu_custom_call.1} parent=1 // pred_fallthru
      _
    // Predicated region
    $region22: #{tpu_custom_call.1} parent=1 // pred_check
      _
    $region23: #{tpu_custom_call.1} parent=1 // pred_check_branch
      %24 = sbr.rel (0) target = $region25
    $region24: #{tpu_custom_call.1} parent=1 // pred_region
      _
    $region25: #{tpu_custom_call.1} parent=1 // pred_fallthru
      _
    // Predicated region
    $region26: #{tpu_custom_call.1} parent=1 // pred_check
      _
    $region27: #{tpu_custom_call.1} parent=1 // pred_check_branch
      %26 = sbr.rel (0) target = $region29
    $region28: #{tpu_custom_call.1} parent=1 // pred_region
      _
    $region29: #{tpu_custom_call.1} parent=1 // pred_fallthru
      _
    %v27 = vld [vmem:[%s0] sm:$0x3]
    %v28 = vld [vmem:[%s1] sm:$0xff]
    %v29 = vld [vmem:[%s1 + $0x8] sm:$0xff]
    %v30 = vld [vmem:[%s1 + $0x10] sm:$0xff]
    %v31 = vld [vmem:[%s1 + $0x18] sm:$0xff]
    %v32 = vld [vmem:[%s1 + $0x20] sm:$0xff]
    %v33 = vld [vmem:[%s1 + $0x28] sm:$0xff]
    %v34 = vld [vmem:[%s1 + $0x30] sm:$0xff]
    %v35 = vld [vmem:[%s1 + $0x38] sm:$0xff]
    %37 = vset.pattern.permute.xlu0 0
    %38 = vperm.xlu0 %37, %v28
    %v39 = vpop.permute.xlu0 %38
    %42 = vset.pattern.permute.xlu0 0
    %43 = vperm.xlu0 %42, %v29
    %v44 = vpop.permute.xlu0 %43
    %47 = vset.pattern.permute.xlu0 0
    %48 = vperm.xlu0 %47, %v30
    %v49 = vpop.permute.xlu0 %48
    %52 = vset.pattern.permute.xlu0 0
    %53 = vperm.xlu0 %52, %v31
    %v54 = vpop.permute.xlu0 %53
    %57 = vset.pattern.permute.xlu0 0
    %58 = vperm.xlu0 %57, %v32
    %v59 = vpop.permute.xlu0 %58
    %62 = vset.pattern.permute.xlu0 0
    %63 = vperm.xlu0 %62, %v33
    %v64 = vpop.permute.xlu0 %63
    %67 = vset.pattern.permute.xlu0 0
    %68 = vperm.xlu0 %67, %v34
    %v69 = vpop.permute.xlu0 %68
    %72 = vset.pattern.permute.xlu0 0
    %73 = vperm.xlu0 %72, %v35
    %v74 = vpop.permute.xlu0 %73
    %v76 = vlaneseq
    %v77 = vshrl.u32 %v76, 7
    %v78 = vsub.s32 0, %v77
    %v79 = vrot.slane %v27, %v78
    %v80 = vmul.f32 %v39, %v79
    %v81 = vmul.f32 %v44, %v79
    %v82 = vmul.f32 %v49, %v79
    %v83 = vmul.f32 %v54, %v79
    %v84 = vmul.f32 %v59, %v79
    %v85 = vmul.f32 %v64, %v79
    %v86 = vmul.f32 %v69, %v79
    %v87 = vmul.f32 %v74, %v79
    %88 = vset.pattern.permute.xlu0 1
    %89 = vperm.xlu0 %88, %v28
    %v90 = vpop.permute.xlu0 %89
    %92 = vset.pattern.permute.xlu0 1
    %93 = vperm.xlu0 %92, %v29
    %v94 = vpop.permute.xlu0 %93
    %96 = vset.pattern.permute.xlu0 1
    %97 = vperm.xlu0 %96, %v30
    %v98 = vpop.permute.xlu0 %97
    %100 = vset.pattern.permute.xlu0 1
    %101 = vperm.xlu0 %100, %v31
    %v102 = vpop.permute.xlu0 %101
    %104 = vset.pattern.permute.xlu0 1
    %105 = vperm.xlu0 %104, %v32
    %v106 = vpop.permute.xlu0 %105
    %108 = vset.pattern.permute.xlu0 1
    %109 = vperm.xlu0 %108, %v33
    %v110 = vpop.permute.xlu0 %109
    %112 = vset.pattern.permute.xlu0 1
    %113 = vperm.xlu0 %112, %v34
    %v114 = vpop.permute.xlu0 %113
    %116 = vset.pattern.permute.xlu0 1
    %117 = vperm.xlu0 %116, %v35
    %v118 = vpop.permute.xlu0 %117
    %v120 = vlaneseq
    %v121 = vshrl.u32 %v120, 7
    %v122 = vsub.s32 1, %v121
    %v123 = vrot.slane %v27, %v122
    %v124 = vmul.f32 %v90, %v123
    %v125 = vmul.f32 %v94, %v123
    %v126 = vmul.f32 %v98, %v123
    %v127 = vmul.f32 %v102, %v123
    %v128 = vmul.f32 %v106, %v123
    %v129 = vmul.f32 %v110, %v123
    %v130 = vmul.f32 %v114, %v123
    %v131 = vmul.f32 %v118, %v123
    %v132 = vadd.f32 %v80, %v124
    %v133 = vadd.f32 %v81, %v125
    %v134 = vadd.f32 %v82, %v126
    %v135 = vadd.f32 %v83, %v127
    %v136 = vadd.f32 %v84, %v128
    %v137 = vadd.f32 %v85, %v129
    %v138 = vadd.f32 %v86, %v130
    %v139 = vadd.f32 %v87, %v131
    %v140 = vld [vmem:[%s2] sm:$0xff]
    %v141 = vld [vmem:[%s2 + $0x8] sm:$0xff]
    %v142 = vld [vmem:[%s2 + $0x10] sm:$0xff]
    %v143 = vld [vmem:[%s2 + $0x18] sm:$0xff]
    %v144 = vld [vmem:[%s2 + $0x20] sm:$0xff]
    %v145 = vld [vmem:[%s2 + $0x28] sm:$0xff]
    %v146 = vld [vmem:[%s2 + $0x30] sm:$0xff]
    %v147 = vld [vmem:[%s2 + $0x38] sm:$0xff]
    %149 = vset.pattern.permute.xlu0 0
    %150 = vperm.xlu0 %149, %v140
    %v151 = vpop.permute.xlu0 %150
    %154 = vset.pattern.permute.xlu0 0
    %155 = vperm.xlu0 %154, %v141
    %v156 = vpop.permute.xlu0 %155
    %159 = vset.pattern.permute.xlu0 0
    %160 = vperm.xlu0 %159, %v142
    %v161 = vpop.permute.xlu0 %160
    %164 = vset.pattern.permute.xlu0 0
    %165 = vperm.xlu0 %164, %v143
    %v166 = vpop.permute.xlu0 %165
    %169 = vset.pattern.permute.xlu0 0
    %170 = vperm.xlu0 %169, %v144
    %v171 = vpop.permute.xlu0 %170
    %174 = vset.pattern.permute.xlu0 0
    %175 = vperm.xlu0 %174, %v145
    %v176 = vpop.permute.xlu0 %175
    %179 = vset.pattern.permute.xlu0 0
    %180 = vperm.xlu0 %179, %v146
    %v181 = vpop.permute.xlu0 %180
    %184 = vset.pattern.permute.xlu0 0
    %185 = vperm.xlu0 %184, %v147
    %v186 = vpop.permute.xlu0 %185
    %v188 = vadd.f32 %v132, %v151
    %v189 = vadd.f32 %v133, %v156
    %v190 = vadd.f32 %v134, %v161
    %v191 = vadd.f32 %v135, %v166
    %v192 = vadd.f32 %v136, %v171
    %v193 = vadd.f32 %v137, %v176
    %v194 = vadd.f32 %v138, %v181
    %v195 = vadd.f32 %v139, %v186
    %v196 = vmax.f32 %v188, 0.0
    %v197 = vmax.f32 %v189, 0.0
    %v198 = vmax.f32 %v190, 0.0
    %v199 = vmax.f32 %v191, 0.0
    %v200 = vmax.f32 %v192, 0.0
    %v201 = vmax.f32 %v193, 0.0
    %v202 = vmax.f32 %v194, 0.0
    %v203 = vmax.f32 %v195, 0.0
    %v204 = vld [vmem:[%s3] sm:$0xff]
    %v205 = vld [vmem:[%s3 + $0x8] sm:$0xff]
    %v206 = vld [vmem:[%s3 + $0x10] sm:$0xff]
    %v207 = vld [vmem:[%s3 + $0x18] sm:$0xff]
    %v208 = vld [vmem:[%s3 + $0x20] sm:$0xff]
    %v209 = vld [vmem:[%s3 + $0x28] sm:$0xff]
    %v210 = vld [vmem:[%s3 + $0x30] sm:$0xff]
    %v211 = vld [vmem:[%s3 + $0x38] sm:$0xff]
    %v212 = vld [vmem:[%s3 + $0x40] sm:$0xff]
    %v213 = vld [vmem:[%s3 + $0x48] sm:$0xff]
    %v214 = vld [vmem:[%s3 + $0x50] sm:$0xff]
    %v215 = vld [vmem:[%s3 + $0x58] sm:$0xff]
    %v216 = vld [vmem:[%s3 + $0x60] sm:$0xff]
    %v217 = vld [vmem:[%s3 + $0x68] sm:$0xff]
    %v218 = vld [vmem:[%s3 + $0x70] sm:$0xff]
    %v219 = vld [vmem:[%s3 + $0x78] sm:$0xff]
    %v220 = vld [vmem:[%s4] sm:$0xff]
    %v221 = vld [vmem:[%s4 + $0x8] sm:$0xff]
    %v222 = vld [vmem:[%s4 + $0x10] sm:$0xff]
    %v223 = vld [vmem:[%s4 + $0x18] sm:$0xff]
    %v224 = vld [vmem:[%s4 + $0x20] sm:$0xff]
    %v225 = vld [vmem:[%s4 + $0x28] sm:$0xff]
    %v226 = vld [vmem:[%s4 + $0x30] sm:$0xff]
    %v227 = vld [vmem:[%s4 + $0x38] sm:$0xff]
    %v228 = vld [vmem:[%s4 + $0x40] sm:$0xff]
    %v229 = vld [vmem:[%s4 + $0x48] sm:$0xff]
    %v230 = vld [vmem:[%s4 + $0x50] sm:$0xff]
    %v231 = vld [vmem:[%s4 + $0x58] sm:$0xff]
    %v232 = vld [vmem:[%s4 + $0x60] sm:$0xff]
    %v233 = vld [vmem:[%s4 + $0x68] sm:$0xff]
    %v234 = vld [vmem:[%s4 + $0x70] sm:$0xff]
    %v235 = vld [vmem:[%s4 + $0x78] sm:$0xff]
    %237 = vset.pattern.permute.xlu0 0
    %238 = vperm.xlu0 %237, %v220
    %v239 = vpop.permute.xlu0 %238
    %242 = vset.pattern.permute.xlu0 0
    %243 = vperm.xlu0 %242, %v221
    %v244 = vpop.permute.xlu0 %243
    %247 = vset.pattern.permute.xlu0 0
    %248 = vperm.xlu0 %247, %v222
    %v249 = vpop.permute.xlu0 %248
    %252 = vset.pattern.permute.xlu0 0
    %253 = vperm.xlu0 %252, %v223
    %v254 = vpop.permute.xlu0 %253
    %257 = vset.pattern.permute.xlu0 0
    %258 = vperm.xlu0 %257, %v224
    %v259 = vpop.permute.xlu0 %258
    %262 = vset.pattern.permute.xlu0 0
    %263 = vperm.xlu0 %262, %v225
    %v264 = vpop.permute.xlu0 %263
    %267 = vset.pattern.permute.xlu0 0
    %268 = vperm.xlu0 %267, %v226
    %v269 = vpop.permute.xlu0 %268
    %272 = vset.pattern.permute.xlu0 0
    %273 = vperm.xlu0 %272, %v227
    %v274 = vpop.permute.xlu0 %273
    %277 = vset.pattern.permute.xlu0 0
    %278 = vperm.xlu0 %277, %v228
    %v279 = vpop.permute.xlu0 %278
    %282 = vset.pattern.permute.xlu0 0
    %283 = vperm.xlu0 %282, %v229
    %v284 = vpop.permute.xlu0 %283
    %287 = vset.pattern.permute.xlu0 0
    %288 = vperm.xlu0 %287, %v230
    %v289 = vpop.permute.xlu0 %288
    %292 = vset.pattern.permute.xlu0 0
    %293 = vperm.xlu0 %292, %v231
    %v294 = vpop.permute.xlu0 %293
    %297 = vset.pattern.permute.xlu0 0
    %298 = vperm.xlu0 %297, %v232
    %v299 = vpop.permute.xlu0 %298
    %302 = vset.pattern.permute.xlu0 0
    %303 = vperm.xlu0 %302, %v233
    %v304 = vpop.permute.xlu0 %303
    %307 = vset.pattern.permute.xlu0 0
    %308 = vperm.xlu0 %307, %v234
    %v309 = vpop.permute.xlu0 %308
    %312 = vset.pattern.permute.xlu0 0
    %313 = vperm.xlu0 %312, %v235
    %v314 = vpop.permute.xlu0 %313
    %vm316 = vcmask 523264
    %v318 = vsel %vm316, %v204, 0
    %v321 = vsel %vm316, %v205, 0
    %v324 = vsel %vm316, %v206, 0
    %v327 = vsel %vm316, %v207, 0
    %v330 = vsel %vm316, %v208, 0
    %v333 = vsel %vm316, %v209, 0
    %v336 = vsel %vm316, %v210, 0
    %v339 = vsel %vm316, %v211, 0
    %v342 = vsel %vm316, %v212, 0
    %v345 = vsel %vm316, %v213, 0
    %v348 = vsel %vm316, %v214, 0
    %v351 = vsel %vm316, %v215, 0
    %v354 = vsel %vm316, %v216, 0
    %v357 = vsel %vm316, %v217, 0
    %v360 = vsel %vm316, %v218, 0
    %v363 = vsel %vm316, %v219, 0
    %365 = vmatprep.subr.mxu0 0.0
    %366 = vmatpush1.msra.mxu0 0.0
    %367 = vmatprep.subr.mxu0 0.0
    %368 = vmatpush1.msra.mxu0 0.0
    %369 = vmatprep.subr.mxu0 0.0
    %370 = vmatpush1.msra.mxu0 0.0
    %371 = vmatprep.subr.mxu0 0.0
    %372 = vmatpush1.msra.mxu0 0.0
    %373 = vmatprep.subr.mxu0 0.0
    %374 = vmatpush1.msra.mxu0 0.0
    %375 = vmatprep.subr.mxu0 0.0
    %376 = vmatpush1.msra.mxu0 0.0
    %377 = vmatprep.subr.mxu0 0.0
    %378 = vmatpush1.msra.mxu0 0.0
    %379 = vmatprep.subr.mxu0 0.0
    %380 = vmatpush1.msra.mxu0 0.0
    %381 = vmatprep.subr.mxu0 0.0
    %382 = vmatpush1.msra.mxu0 %v203
    %383 = vmatprep.subr.mxu0 0.0
    %384 = vmatpush1.msra.mxu0 %v202
    %385 = vmatprep.subr.mxu0 0.0
    %386 = vmatpush1.msra.mxu0 %v201
    %387 = vmatprep.subr.mxu0 0.0
    %388 = vmatpush1.msra.mxu0 %v200
    %389 = vmatprep.subr.mxu0 0.0
    %390 = vmatpush1.msra.mxu0 %v199
    %391 = vmatprep.subr.mxu0 0.0
    %392 = vmatpush1.msra.mxu0 %v198
    %393 = vmatprep.subr.mxu0 0.0
    %394 = vmatpush1.msra.mxu0 %v197
    %395 = vmatprep.subr.mxu0 0.0
    %396 = vmatpush1.msra.mxu0 %v196
    %397 = vmatprep.subr.mxu0 0.0
    %398 = vmatpush2.msra.mxu0 0.0
    %399 = vmatprep.subr.mxu0 0.0
    %400 = vmatpush2.msra.mxu0 0.0
    %401 = vmatprep.subr.mxu0 0.0
    %402 = vmatpush2.msra.mxu0 0.0
    %403 = vmatprep.subr.mxu0 0.0
    %404 = vmatpush2.msra.mxu0 0.0
    %405 = vmatprep.subr.mxu0 0.0
    %406 = vmatpush2.msra.mxu0 0.0
    %407 = vmatprep.subr.mxu0 0.0
    %408 = vmatpush2.msra.mxu0 0.0
    %409 = vmatprep.subr.mxu0 0.0
    %410 = vmatpush2.msra.mxu0 0.0
    %411 = vmatprep.subr.mxu0 0.0
    %412 = vmatpush2.msra.mxu0 0.0
    %413 = vmatprep.subr.mxu0 0.0
    %414 = vmatpush2.msra.mxu0 0.0
    %415 = vmatprep.subr.mxu0 0.0
    %416 = vmatpush2.msra.mxu0 0.0
    %417 = vmatprep.subr.mxu0 0.0
    %418 = vmatpush2.msra.mxu0 0.0
    %419 = vmatprep.subr.mxu0 0.0
    %420 = vmatpush2.msra.mxu0 0.0
    %421 = vmatprep.subr.mxu0 0.0
    %422 = vmatpush2.msra.mxu0 0.0
    %423 = vmatprep.subr.mxu0 0.0
    %424 = vmatpush2.msra.mxu0 0.0
    %425 = vmatprep.subr.mxu0 0.0
    %426 = vmatpush2.msra.mxu0 0.0
    %427 = vmatprep.subr.mxu0 0.0
    %428 = vmatpush2.msra.mxu0 0.0
    %429 = vmatprep.mubr.f32.mxu0 0.0
    %430 = vmatmul.mubr.f32.gmra.mxu0 %v318
    %v431 = vpop.f32.mrf.mxu0
    %v432 = vadd.f32 %v239, %v431
    %v433 = vpop.f32.mrf.mxu0
    %434 = vmatprep.mubr.f32.mxu0 0.0
    %435 = vmatmul.mubr.f32.gmra.mxu0 %v321
    %v436 = vpop.f32.mrf.mxu0
    %v437 = vadd.f32 %v244, %v436
    %v438 = vpop.f32.mrf.mxu0
    %439 = vmatprep.mubr.f32.mxu0 0.0
    %440 = vmatmul.mubr.f32.gmra.mxu0 %v324
    %v441 = vpop.f32.mrf.mxu0
    %v442 = vadd.f32 %v249, %v441
    %v443 = vpop.f32.mrf.mxu0
    %444 = vmatprep.mubr.f32.mxu0 0.0
    %445 = vmatmul.mubr.f32.gmra.mxu0 %v327
    %v446 = vpop.f32.mrf.mxu0
    %v447 = vadd.f32 %v254, %v446
    %v448 = vpop.f32.mrf.mxu0
    %449 = vmatprep.mubr.f32.mxu0 0.0
    %450 = vmatmul.mubr.f32.gmra.mxu0 %v330
    %v451 = vpop.f32.mrf.mxu0
    %v452 = vadd.f32 %v259, %v451
    %v453 = vpop.f32.mrf.mxu0
    %454 = vmatprep.mubr.f32.mxu0 0.0
    %455 = vmatmul.mubr.f32.gmra.mxu0 %v333
    %v456 = vpop.f32.mrf.mxu0
    %v457 = vadd.f32 %v264, %v456
    %v458 = vpop.f32.mrf.mxu0
    %459 = vmatprep.mubr.f32.mxu0 0.0
    %460 = vmatmul.mubr.f32.gmra.mxu0 %v336
    %v461 = vpop.f32.mrf.mxu0
    %v462 = vadd.f32 %v269, %v461
    %v463 = vpop.f32.mrf.mxu0
    %464 = vmatprep.mubr.f32.mxu0 0.0
    %465 = vmatmul.mubr.f32.gmra.mxu0 %v339
    %v466 = vpop.f32.mrf.mxu0
    %v467 = vadd.f32 %v274, %v466
    %v468 = vpop.f32.mrf.mxu0
    %469 = vmatprep.mubr.f32.mxu0 0.0
    %470 = vmatmul.mubr.f32.gmra.mxu0 %v342
    %v471 = vpop.f32.mrf.mxu0
    %v472 = vadd.f32 %v279, %v471
    %v473 = vpop.f32.mrf.mxu0
    %474 = vmatprep.mubr.f32.mxu0 0.0
    %475 = vmatmul.mubr.f32.gmra.mxu0 %v345
    %v476 = vpop.f32.mrf.mxu0
    %v477 = vadd.f32 %v284, %v476
    %v478 = vpop.f32.mrf.mxu0
    %479 = vmatprep.mubr.f32.mxu0 0.0
    %480 = vmatmul.mubr.f32.gmra.mxu0 %v348
    %v481 = vpop.f32.mrf.mxu0
    %v482 = vadd.f32 %v289, %v481
    %v483 = vpop.f32.mrf.mxu0
    %484 = vmatprep.mubr.f32.mxu0 0.0
    %485 = vmatmul.mubr.f32.gmra.mxu0 %v351
    %v486 = vpop.f32.mrf.mxu0
    %v487 = vadd.f32 %v294, %v486
    %v488 = vpop.f32.mrf.mxu0
    %489 = vmatprep.mubr.f32.mxu0 0.0
    %490 = vmatmul.mubr.f32.gmra.mxu0 %v354
    %v491 = vpop.f32.mrf.mxu0
    %v492 = vadd.f32 %v299, %v491
    %v493 = vpop.f32.mrf.mxu0
    %494 = vmatprep.mubr.f32.mxu0 0.0
    %495 = vmatmul.mubr.f32.gmra.mxu0 %v357
    %v496 = vpop.f32.mrf.mxu0
    %v497 = vadd.f32 %v304, %v496
    %v498 = vpop.f32.mrf.mxu0
    %499 = vmatprep.mubr.f32.mxu0 0.0
    %500 = vmatmul.mubr.f32.gmra.mxu0 %v360
    %v501 = vpop.f32.mrf.mxu0
    %v502 = vadd.f32 %v309, %v501
    %v503 = vpop.f32.mrf.mxu0
    %504 = vmatprep.mubr.f32.mxu0 0.0
    %505 = vmatmul.mubr.f32.gmra.mxu0 %v363
    %v506 = vpop.f32.mrf.mxu0
    %v507 = vadd.f32 %v314, %v506
    %v508 = vpop.f32.mrf.mxu0
    %509 = vdwg.mxu0
    %v510 = vmax.f32 %v432, 0.0
    %v511 = vmax.f32 %v437, 0.0
    %v512 = vmax.f32 %v442, 0.0
    %v513 = vmax.f32 %v447, 0.0
    %v514 = vmax.f32 %v452, 0.0
    %v515 = vmax.f32 %v457, 0.0
    %v516 = vmax.f32 %v462, 0.0
    %v517 = vmax.f32 %v467, 0.0
    %v518 = vmax.f32 %v472, 0.0
    %v519 = vmax.f32 %v477, 0.0
    %v520 = vmax.f32 %v482, 0.0
    %v521 = vmax.f32 %v487, 0.0
    %v522 = vmax.f32 %v492, 0.0
    %v523 = vmax.f32 %v497, 0.0
    %v524 = vmax.f32 %v502, 0.0
    %v525 = vmax.f32 %v507, 0.0
    %v526 = vld [vmem:[%s5] sm:$0x7]
    %v527 = vld [vmem:[%s6] sm:$0x7]
    %529 = vset.pattern.permute.xlu0 0
    %530 = vperm.xlu0 %529, %v527
    %v531 = vpop.permute.xlu0 %530
    %533 = vmatprep.subr.mxu0 0.0
    %534 = vmatpush1.msra.mxu0 %v525
    %535 = vmatprep.subr.mxu0 0.0
    %536 = vmatpush1.msra.mxu0 %v524
    %537 = vmatprep.subr.mxu0 0.0
    %538 = vmatpush1.msra.mxu0 %v523
    %539 = vmatprep.subr.mxu0 0.0
    %540 = vmatpush1.msra.mxu0 %v522
    %541 = vmatprep.subr.mxu0 0.0
    %542 = vmatpush1.msra.mxu0 %v521
    %543 = vmatprep.subr.mxu0 0.0
    %544 = vmatpush1.msra.mxu0 %v520
    %545 = vmatprep.subr.mxu0 0.0
    %546 = vmatpush1.msra.mxu0 %v519
    %547 = vmatprep.subr.mxu0 0.0
    %548 = vmatpush1.msra.mxu0 %v518
    %549 = vmatprep.subr.mxu0 0.0
    %550 = vmatpush1.msra.mxu0 %v517
    %551 = vmatprep.subr.mxu0 0.0
    %552 = vmatpush1.msra.mxu0 %v516
    %553 = vmatprep.subr.mxu0 0.0
    %554 = vmatpush1.msra.mxu0 %v515
    %555 = vmatprep.subr.mxu0 0.0
    %556 = vmatpush1.msra.mxu0 %v514
    %557 = vmatprep.subr.mxu0 0.0
    %558 = vmatpush1.msra.mxu0 %v513
    %559 = vmatprep.subr.mxu0 0.0
    %560 = vmatpush1.msra.mxu0 %v512
    %561 = vmatprep.subr.mxu0 0.0
    %562 = vmatpush1.msra.mxu0 %v511
    %563 = vmatprep.subr.mxu0 0.0
    %564 = vmatpush1.msra.mxu0 %v510
    %565 = vmatprep.subr.mxu0 0.0
    %566 = vmatpush2.msra.mxu0 0.0
    %567 = vmatprep.subr.mxu0 0.0
    %568 = vmatpush2.msra.mxu0 0.0
    %569 = vmatprep.subr.mxu0 0.0
    %570 = vmatpush2.msra.mxu0 0.0
    %571 = vmatprep.subr.mxu0 0.0
    %572 = vmatpush2.msra.mxu0 0.0
    %573 = vmatprep.subr.mxu0 0.0
    %574 = vmatpush2.msra.mxu0 0.0
    %575 = vmatprep.subr.mxu0 0.0
    %576 = vmatpush2.msra.mxu0 0.0
    %577 = vmatprep.subr.mxu0 0.0
    %578 = vmatpush2.msra.mxu0 0.0
    %579 = vmatprep.subr.mxu0 0.0
    %580 = vmatpush2.msra.mxu0 0.0
    %581 = vmatprep.subr.mxu0 0.0
    %582 = vmatpush2.msra.mxu0 0.0
    %583 = vmatprep.subr.mxu0 0.0
    %584 = vmatpush2.msra.mxu0 0.0
    %585 = vmatprep.subr.mxu0 0.0
    %586 = vmatpush2.msra.mxu0 0.0
    %587 = vmatprep.subr.mxu0 0.0
    %588 = vmatpush2.msra.mxu0 0.0
    %589 = vmatprep.subr.mxu0 0.0
    %590 = vmatpush2.msra.mxu0 0.0
    %591 = vmatprep.subr.mxu0 0.0
    %592 = vmatpush2.msra.mxu0 0.0
    %593 = vmatprep.subr.mxu0 0.0
    %594 = vmatpush2.msra.mxu0 0.0
    %595 = vmatprep.subr.mxu0 0.0
    %596 = vmatpush2.msra.mxu0 0.0
    %597 = vmatprep.mubr.f32.mxu0 0.0
    %598 = vmatmul.mubr.f32.gmra.mxu0 %v526
    %v599 = vpop.f32.mrf.mxu0
    %v600 = vadd.f32 %v531, %v599
    %v601 = vpop.f32.mrf.mxu0
    %602 = vdwg.mxu0
    %603 = vst [vmem:[#allocation2] sm:$0x7] %v600
    // Predicated region
    $region30: #{tpu_custom_call.1} parent=1 // pred_check
      _
    $region31: #{tpu_custom_call.1} parent=1 // pred_check_branch
      %605 = sbr.rel (0) target = $region33
    $region32: #{tpu_custom_call.1} parent=1 // pred_region
      %s607 = ssub.s32 64, 64
      %608 = vsyncadd [#allocation3], %s607
      %s610 = sshll.u32 [#allocation2], 4
      %s611 = int_to_ptr.vmem [resolvable:$true] %s610
      %613 = dma.vmem_to_hbm [thread:$0]  %s611, 64, %s7, [#allocation3]
    $region33: #{tpu_custom_call.1} parent=1 // pred_fallthru
      _
    // Predicated region
    $region34: #{tpu_custom_call.1} parent=1 // pred_check
      _
    $region35: #{tpu_custom_call.1} parent=1 // pred_check_branch
      %615 = sbr.rel (0) target = $region37
    $region36: #{tpu_custom_call.1} parent=1 // pred_region
      %616 = dma.done [#allocation3], 64
    $region37: #{tpu_custom_call.1} parent=1 // pred_fallthru
      _
    %617 = vsyncpa [#allocation3], 1

</llo_original>
